<compile_context>
chip_gen: v7x
topology: tpu7x:2x2x1
jax: 0.10.0
libtpu: 0.0.40
codegen_flags: <defaults>
</compile_context>

<pallas_src>
import functools

import jax
import jax.numpy as jnp
from jax.experimental import pallas as pl
from jax.experimental.pallas import tpu as pltpu


LANES = 512          # multiple of 128 and of 4 -> coordinate quadruples never straddle rows
DEFAULT_TILE_R = 1024  # 1024*512*4B = 2 MiB per f32 input block; x2 inputs x2 bufs = 8 MiB


def _round_up(x, m):
    return ((x + m - 1) // m) * m


def _stereo_noise_loss_kernel(pred_ref, gt_ref, out_ref, *,
                              sqrt_noise_loss, tile_r, total_rows, mask_rows):
    """One program: lane-dense (tile_r, LANES) chunk -> (1, 1, LANES) partial sums."""
    d = pred_ref[...].astype(jnp.float32) - gt_ref[...].astype(jnp.float32)
    sq = d * d                                                   # (tile_r, LANES)

    if sqrt_noise_loss:
        # Lanes hold interleaved (x1, y1, x2, y2, x1, ...).  For every even lane i,
        # sq[i] + sq[i+1] is one view's squared distance; sqrt it, keep even lanes.
        pair = sq + pltpu.roll(sq, shift=LANES - 1, axis=1)      # pair[i] = sq[i] + sq[i+1]
        lane = jax.lax.broadcasted_iota(jnp.int32, (1, LANES), 1)
        even_mask = ((lane & 1) == 0).astype(jnp.float32)        # tiny (1, LANES) 0/1 mask
        contrib = jnp.sqrt(pair) * even_mask
        # TODO(synk): if EUP ever binds on v7x, compact even-lane pairs to LANES//2
        # before the sqrt (XLU deinterleave); DMA dominates on v5e/v6e.
    else:
        # err1 + err2 == sum of all four squared coordinate diffs: no pairing needed.
        contrib = sq

    if mask_rows:
        # Ragged last chunk: rows >= total_rows are out-of-bounds garbage; kill
        # them with a select (handles NaN/Inf garbage, unlike a mask multiply).
        base = pl.program_id(0) * tile_r
        row = base + jax.lax.broadcasted_iota(jnp.int32, (tile_r, 1), 0)
        contrib = jnp.where(row < total_rows, contrib, jnp.float32(0.0))

    # Reduce only over sublanes; keep the lane-dense 512-wide partial.
    out_ref[...] = jnp.sum(contrib, axis=0, keepdims=True).reshape(1, 1, LANES)


def stereo_noise_loss(corrected_pts, noise_free_pts, *, sqrt_noise_loss=True,
                      tile_r=DEFAULT_TILE_R):
    """corrected_pts / noise_free_pts: (B, N, 4) stereo points (x1, y1, x2, y2).

    Returns scalar loss = mean over (B, N) of (noise_err1 + noise_err2).
    Inputs may be f32 or bf16; accumulation is always f32.
    """
    B, N, C = corrected_pts.shape
    assert C == 4
    total = B * N * 4

    # Zero-copy flatten of the native contiguous layout; pad only the (rare)
    # remainder so the flat length is a multiple of LANES.  Padded zeros in
    # BOTH inputs contribute exactly 0 (sqrt(0) = 0).
    pred_flat = corrected_pts.reshape(-1)
    gt_flat = noise_free_pts.reshape(-1)
    pad = (-total) % LANES
    if pad:
        pred_flat = jnp.pad(pred_flat, (0, pad))
        gt_flat = jnp.pad(gt_flat, (0, pad))
    total_rows = (total + pad) // LANES
    pred = pred_flat.reshape(total_rows, LANES)
    gt = gt_flat.reshape(total_rows, LANES)

    # Fixed large tile + cdiv grid (no exact-divisor search); clamp for tiny inputs.
    tile_r = max(8, min(tile_r, _round_up(total_rows, 8)))
    n_chunks = pl.cdiv(total_rows, tile_r)
    mask_rows = (total_rows % tile_r) != 0

    itemsize = jnp.dtype(pred.dtype).itemsize
    tile_bytes = tile_r * LANES * itemsize
    # 2 inputs x 2 pipeline buffers + slack for output/scratch.
    vmem_limit = min(2 * 2 * tile_bytes + (8 << 20), 100 << 20)

    kernel = functools.partial(
        _stereo_noise_loss_kernel,
        sqrt_noise_loss=sqrt_noise_loss,
        tile_r=tile_r,
        total_rows=total_rows,
        mask_rows=mask_rows,
    )

    cost = pl.CostEstimate(
        flops=3 * total,
        transcendentals=(2 * B * N) if sqrt_noise_loss else 0,
        bytes_accessed=2 * total * itemsize + n_chunks * LANES * 4,
    )

    partials = pl.pallas_call(
        kernel,
        out_shape=jax.ShapeDtypeStruct((n_chunks, 1, LANES), jnp.float32),
        grid_spec=pltpu.PrefetchScalarGridSpec(
            num_scalar_prefetch=0,
            grid=(n_chunks,),
            in_specs=[
                pl.BlockSpec((tile_r, LANES), lambda c: (c, 0)),
                pl.BlockSpec((tile_r, LANES), lambda c: (c, 0)),
            ],
            out_specs=pl.BlockSpec((1, 1, LANES), lambda c: (c, 0, 0)),
        ),
        compiler_params=pltpu.CompilerParams(
            dimension_semantics=("parallel",),
            vmem_limit_bytes=vmem_limit,
        ),
        cost_estimate=cost,
    )(pred, gt)

    return jnp.sum(partials) / jnp.float32(B * N)


def _reference(corrected_pts, noise_free_pts, sqrt_noise_loss):
    d = (corrected_pts - noise_free_pts).astype(jnp.float32)
    sq = d * d
    err1 = sq[..., 0] + sq[..., 1]
    err2 = sq[..., 2] + sq[..., 3]
    if sqrt_noise_loss:
        err1 = jnp.sqrt(err1)
        err2 = jnp.sqrt(err2)
    return (err1 + err2).mean()


if __name__ == "__main__":
    key = jax.random.PRNGKey(0)

    ok = True

    def _check(B, N, sqrt_flag, tile_r=DEFAULT_TILE_R):
        global ok
        k1, k2 = jax.random.split(jax.random.fold_in(key, B * 131 + N), 2)
        gt_pts = jax.random.uniform(k1, (B, N, 4), dtype=jnp.float32) * 16.0
        corrected = gt_pts + 0.1 * jax.random.normal(k2, (B, N, 4), jnp.float32)
        loss = stereo_noise_loss(corrected, gt_pts, sqrt_noise_loss=sqrt_flag,
                                 tile_r=tile_r)
        loss = jax.block_until_ready(loss)
        ref = _reference(corrected, gt_pts, sqrt_flag)
        good = bool(jnp.allclose(loss, ref, rtol=1e-5, atol=1e-6))
        ok = ok and good
        assert good, (B, N, sqrt_flag, tile_r, loss, ref)

    # Small canonical case: 2 images, 1024 stereo point pairs, 4 coords each.
    _check(2, 1024, True)
    _check(2, 1024, False)
    # Force a multi-step grid (exercises the 1-D pipelined grid).
    _check(2, 1024, True, tile_r=8)
    # Ragged last chunk (row-mask path) and flat padding path.
    _check(1, 640, True)
    _check(1, 100, True)

    if ok:
        print("KERNEL_OK")
</pallas_src>

<mosaic_0001>
module attributes {stable_mosaic.version = 11 : i64} {
  func.func @_stereo_noise_loss_kernel(%arg0: i32, %arg1: memref<16x512xf32, #tpu.memory_space<vmem>>, %arg2: memref<16x512xf32, #tpu.memory_space<vmem>>, %arg3: memref<1x1x512xf32, #tpu.memory_space<vmem>>) attributes {dimension_semantics = [#tpu.dimension_semantics<parallel>], iteration_bounds = array<i64: 1>, scalar_prefetch = 0 : i64, scratch_operands = 0 : i64, tpu.core_type = #tpu.core_type<tc>, window_params = [{transform_indices = @transform_0, window_bounds = array<i64: 16, 512>}, {transform_indices = @transform_1, window_bounds = array<i64: 16, 512>}, {transform_indices = @transform_2, window_bounds = array<i64: 1, 1, 512>}]} {
    %c0 = arith.constant 0 : index
    %c0_0 = arith.constant 0 : index
    %0 = vector.load %arg1[%c0, %c0_0] : memref<16x512xf32, #tpu.memory_space<vmem>>, vector<16x512xf32>
    %c0_1 = arith.constant 0 : index
    %c0_2 = arith.constant 0 : index
    %1 = vector.load %arg2[%c0_1, %c0_2] : memref<16x512xf32, #tpu.memory_space<vmem>>, vector<16x512xf32>
    %2 = arith.subf %0, %1 : vector<16x512xf32>
    %3 = arith.mulf %2, %2 : vector<16x512xf32>
    %c511_i32 = arith.constant 511 : i32
    %4 = tpu.dynamic_rotate %3 by %c511_i32 dim 1 : vector<16x512xf32>, i32 -> vector<16x512xf32>
    %5 = arith.addf %3, %4 : vector<16x512xf32>
    %6 = tpu.iota {dimensions = array<i32: 1>} : vector<1x512xi32>
    %c1_i32 = arith.constant 1 : i32
    %7 = vector.broadcast %c1_i32 : i32 to vector<1x512xi32>
    %8 = arith.andi %6, %7 : vector<1x512xi32>
    %c0_i32 = arith.constant 0 : i32
    %9 = vector.broadcast %c0_i32 : i32 to vector<1x512xi32>
    %10 = arith.cmpi eq, %8, %9 : vector<1x512xi32>
    %11 = arith.extui %10 : vector<1x512xi1> to vector<1x512xi32>
    %12 = arith.sitofp %11 : vector<1x512xi32> to vector<1x512xf32>
    %13 = math.sqrt %5 : vector<16x512xf32>
    %14 = vector.broadcast %12 : vector<1x512xf32> to vector<16x512xf32>
    %15 = arith.mulf %13, %14 : vector<16x512xf32>
    %cst = arith.constant dense<0.000000e+00> : vector<512xf32>
    %16 = vector.multi_reduction <add>, %15, %cst [0] : vector<16x512xf32> to vector<512xf32>
    %17 = vector.shape_cast %16 : vector<512xf32> to vector<1x512xf32>
    %18 = vector.shape_cast %17 : vector<1x512xf32> to vector<1x1x512xf32>
    %c0_3 = arith.constant 0 : index
    %c0_4 = arith.constant 0 : index
    %c0_5 = arith.constant 0 : index
    %19 = vector.load %arg3[%c0_3, %c0_4, %c0_5] : memref<1x1x512xf32, #tpu.memory_space<vmem>>, vector<1x1x512xf32>
    tpu.vector_store %arg3[%c0_3, %c0_4, %c0_5], %18 {strides = array<i32>} : memref<1x1x512xf32, #tpu.memory_space<vmem>>, vector<1x1x512xf32>,
    return
  }
  func.func @transform_0(%arg0: i32) -> (i32, i32) {
    %c0_i32 = arith.constant 0 : i32
    %c0_i32_0 = arith.constant 0 : i32
    return %arg0, %c0_i32 : i32, i32
  }
  func.func @transform_1(%arg0: i32) -> (i32, i32) {
    %c0_i32 = arith.constant 0 : i32
    %c0_i32_0 = arith.constant 0 : i32
    return %arg0, %c0_i32 : i32, i32
  }
  func.func @transform_2(%arg0: i32) -> (i32, i32, i32) {
    %c0_i32 = arith.constant 0 : i32
    %c0_i32_0 = arith.constant 0 : i32
    %c0_i32_1 = arith.constant 0 : i32
    return %arg0, %c0_i32, %c0_i32_0 : i32, i32, i32
  }
}

</mosaic_0001>

<llo_original>
// kernel: tpu_custom_call.1
$region0: #{tpu_custom_call.1}
  #allocation0 [shape = 'u32[]', space=smem, size = 0x4, offset = 0x4, fixed_abs, tag = 'smem constant byte address 0x4 - core index']
  #allocation1 [shape = 'u32[144,128]{1,0:T(1,128)}', space=vmem, size = 0x12000, scoped, tag = 'internal scratch']
  %s0 = inlined_call_operand.hbm [shape: f32[16,512], index: 0, kind: input, shape index: {}]
  %s1 = inlined_call_operand.hbm [shape: f32[16,512], index: 1, kind: input, shape index: {}]
  %s2 = inlined_call_operand.hbm [shape: f32[1,1,512], index: 2, kind: output, shape index: {}]
  %s3 = sld [smem:[#allocation0]]
  $region26: #{tpu_custom_call.1} parent=0
    _
  %s5 = ssub.s32 1, %s3
  %s6 = scalar_select 0, %s5, %s3
  $region1: #{tpu_custom_call.1} parent=0
    #allocation2 [shape = 'u8[32768]{0}', space=vmem, size = 0x8000, scoped, tag = 'input window, operand 0, single buffered']
    #allocation3 [shape = 's32[1]{0}', space=sflag, size = 0x4, scoped, tag = 'scoped memory for tpu_custom_call.1']
    #allocation4 [shape = 's32[1]{0}', space=sflag, size = 0x4, scoped, tag = 'scoped memory for tpu_custom_call.1']
    #allocation5 [shape = 'u8[32768]{0}', space=vmem, size = 0x8000, scoped, tag = 'input window, operand 1, single buffered']
    #allocation6 [shape = 's32[1]{0}', space=sflag, size = 0x4, scoped, tag = 'scoped memory for tpu_custom_call.1']
    #allocation7 [shape = 'u8[2048]{0}', space=vmem, size = 0x800, scoped, tag = 'output window, operand 0, single buffered']
    %7 = vsyncpa [#allocation3], 0
    %8 = vsyncpa [#allocation6], 0
    %9 = vsyncpa [#allocation4], 0
    // Predicated region
    $region2: #{tpu_custom_call.1} parent=1 // pred_check
      _
    $region3: #{tpu_custom_call.1} parent=1 // pred_check_branch
      %11 = sbr.rel (0) target = $region5
    $region4: #{tpu_custom_call.1} parent=1 // pred_region
      %s13 = ssub.s32 1024, 1024
      %14 = vsyncadd [#allocation3], %s13
      %s15 = sshll.u32 [#allocation2], 4
      %s16 = int_to_ptr.vmem [resolvable:$true] %s15
      %21 = dma.hbm_to_vmem [thread:$0]  %s0, 1024, %s16, [#allocation3], 512, 512, 32
    $region5: #{tpu_custom_call.1} parent=1 // pred_fallthru
      _
    // Predicated region
    $region6: #{tpu_custom_call.1} parent=1 // pred_check
      _
    $region7: #{tpu_custom_call.1} parent=1 // pred_check_branch
      %23 = sbr.rel (0) target = $region9
    $region8: #{tpu_custom_call.1} parent=1 // pred_region
      %s25 = ssub.s32 1024, 1024
      %26 = vsyncadd [#allocation6], %s25
      %s27 = sshll.u32 [#allocation5], 4
      %s28 = int_to_ptr.vmem [resolvable:$true] %s27
      %33 = dma.hbm_to_vmem [thread:$0]  %s1, 1024, %s28, [#allocation6], 512, 512, 32
    $region9: #{tpu_custom_call.1} parent=1 // pred_fallthru
      _
    // Predicated region
    $region10: #{tpu_custom_call.1} parent=1 // pred_check
      _
    $region11: #{tpu_custom_call.1} parent=1 // pred_check_branch
      %35 = sbr.rel (0) target = $region13
    $region12: #{tpu_custom_call.1} parent=1 // pred_region
      %36 = dma.done [#allocation3], 1024
    $region13: #{tpu_custom_call.1} parent=1 // pred_fallthru
      _
    // Predicated region
    $region14: #{tpu_custom_call.1} parent=1 // pred_check
      _
    $region15: #{tpu_custom_call.1} parent=1 // pred_check_branch
      %38 = sbr.rel (0) target = $region17
    $region16: #{tpu_custom_call.1} parent=1 // pred_region
      %39 = dma.done [#allocation6], 1024
    $region17: #{tpu_custom_call.1} parent=1 // pred_fallthru
      _
    %v40 = vld [vmem:[#allocation2] sm:$0xff]
    %v41 = vld [vmem:[#allocation2 + $0x8] sm:$0xff]
    %v42 = vld [vmem:[#allocation2 + $0x10] sm:$0xff]
    %v43 = vld [vmem:[#allocation2 + $0x18] sm:$0xff]
    %v44 = vld [vmem:[#allocation2 + $0x20] sm:$0xff]
    %v45 = vld [vmem:[#allocation2 + $0x28] sm:$0xff]
    %v46 = vld [vmem:[#allocation2 + $0x30] sm:$0xff]
    %v47 = vld [vmem:[#allocation2 + $0x38] sm:$0xff]
    %v48 = vld [vmem:[#allocation5] sm:$0xff]
    %v49 = vld [vmem:[#allocation5 + $0x8] sm:$0xff]
    %v50 = vld [vmem:[#allocation5 + $0x10] sm:$0xff]
    %v51 = vld [vmem:[#allocation5 + $0x18] sm:$0xff]
    %v52 = vld [vmem:[#allocation5 + $0x20] sm:$0xff]
    %v53 = vld [vmem:[#allocation5 + $0x28] sm:$0xff]
    %v54 = vld [vmem:[#allocation5 + $0x30] sm:$0xff]
    %v55 = vld [vmem:[#allocation5 + $0x38] sm:$0xff]
    %v56 = vsub.f32 %v40, %v48
    %v57 = vsub.f32 %v41, %v49
    %v58 = vsub.f32 %v42, %v50
    %v59 = vsub.f32 %v43, %v51
    %v60 = vsub.f32 %v44, %v52
    %v61 = vsub.f32 %v45, %v53
    %v62 = vsub.f32 %v46, %v54
    %v63 = vsub.f32 %v47, %v55
    %v64 = vmul.f32 %v56, %v56
    %v65 = vmul.f32 %v57, %v57
    %v66 = vmul.f32 %v58, %v58
    %v67 = vmul.f32 %v59, %v59
    %v68 = vmul.f32 %v60, %v60
    %v69 = vmul.f32 %v61, %v61
    %v70 = vmul.f32 %v62, %v62
    %v71 = vmul.f32 %v63, %v63
    %72 = vrot.lane.b32.xlu0 %v64, 127
    %v73 = vpop.permute.xlu0 %72
    %74 = vrot.lane.b32.xlu0 %v68, 127
    %v75 = vpop.permute.xlu0 %74
    %76 = vrot.lane.b32.xlu0 %v65, 127
    %v77 = vpop.permute.xlu0 %76
    %78 = vrot.lane.b32.xlu0 %v69, 127
    %v79 = vpop.permute.xlu0 %78
    %80 = vrot.lane.b32.xlu0 %v66, 127
    %v81 = vpop.permute.xlu0 %80
    %82 = vrot.lane.b32.xlu0 %v70, 127
    %v83 = vpop.permute.xlu0 %82
    %84 = vrot.lane.b32.xlu0 %v67, 127
    %v85 = vpop.permute.xlu0 %84
    %86 = vrot.lane.b32.xlu0 %v71, 127
    %v87 = vpop.permute.xlu0 %86
    %v88 = vlaneseq
    %v89 = vand.u32 %v88, 127
    %vm90 = vcmp.lt.s32.totalorder %v89, 127
    %v91 = vsel %vm90, %v81, %v85
    %v92 = vsel %vm90, %v83, %v87
    %v93 = vsel %vm90, %v77, %v81
    %v94 = vsel %vm90, %v79, %v83
    %v95 = vsel %vm90, %v73, %v77
    %v96 = vsel %vm90, %v75, %v79
    %v97 = vsel %vm90, %v85, %v73
    %v98 = vsel %vm90, %v87, %v75
    %v99 = vadd.f32 %v64, %v95
    %v100 = vadd.f32 %v65, %v93
    %v101 = vadd.f32 %v66, %v91
    %v102 = vadd.f32 %v67, %v97
    %v103 = vadd.f32 %v68, %v96
    %v104 = vadd.f32 %v69, %v94
    %v105 = vadd.f32 %v70, %v92
    %v106 = vadd.f32 %v71, %v98
    %v107 = vadd.s32 %v89, 128
    %v108 = vadd.s32 %v89, 256
    %v109 = vadd.s32 %v89, 384
    %v110 = vand.u32 %v89, 1
    %v111 = vand.u32 %v107, 1
    %v112 = vand.u32 %v108, 1
    %v113 = vand.u32 %v109, 1
    %vm114 = vcmp.eq.s32.totalorder %v110, 0
    %vm115 = vcmp.eq.s32.totalorder %v111, 0
    %vm116 = vcmp.eq.s32.totalorder %v112, 0
    %vm117 = vcmp.eq.s32.totalorder %v113, 0
    %v118 = vsel %vm114, 1, 0
    %v119 = vsel %vm115, 1, 0
    %v120 = vsel %vm116, 1, 0
    %v121 = vsel %vm117, 1, 0
    %v122 = vcvt.s32.f32 %v118
    %v123 = vcvt.s32.f32 %v119
    %v124 = vcvt.s32.f32 %v120
    %v125 = vcvt.s32.f32 %v121
    %v126 = vrsqrt.pop %v99
    %v127 = vmul.f32 %v99, %v126
    %vm128 = vcmp.eq.f32.partialorder %v99, inf
    %v129 = vsel %vm128, %v99, %v127
    %vm130 = vcmp.eq.f32.partialorder %v99, 0.0
    %v131 = vand.u32 %v99, 2147483648
    %v132 = vsel %vm130, %v131, %v129
    %v133 = vrsqrt.pop %v100
    %v134 = vmul.f32 %v100, %v133
    %vm135 = vcmp.eq.f32.partialorder %v100, inf
    %v136 = vsel %vm135, %v100, %v134
    %vm137 = vcmp.eq.f32.partialorder %v100, 0.0
    %v138 = vand.u32 %v100, 2147483648
    %v139 = vsel %vm137, %v138, %v136
    %v140 = vrsqrt.pop %v101
    %v141 = vmul.f32 %v101, %v140
    %vm142 = vcmp.eq.f32.partialorder %v101, inf
    %v143 = vsel %vm142, %v101, %v141
    %vm144 = vcmp.eq.f32.partialorder %v101, 0.0
    %v145 = vand.u32 %v101, 2147483648
    %v146 = vsel %vm144, %v145, %v143
    %v147 = vrsqrt.pop %v102
    %v148 = vmul.f32 %v102, %v147
    %vm149 = vcmp.eq.f32.partialorder %v102, inf
    %v150 = vsel %vm149, %v102, %v148
    %vm151 = vcmp.eq.f32.partialorder %v102, 0.0
    %v152 = vand.u32 %v102, 2147483648
    %v153 = vsel %vm151, %v152, %v150
    %v154 = vrsqrt.pop %v103
    %v155 = vmul.f32 %v103, %v154
    %vm156 = vcmp.eq.f32.partialorder %v103, inf
    %v157 = vsel %vm156, %v103, %v155
    %vm158 = vcmp.eq.f32.partialorder %v103, 0.0
    %v159 = vand.u32 %v103, 2147483648
    %v160 = vsel %vm158, %v159, %v157
    %v161 = vrsqrt.pop %v104
    %v162 = vmul.f32 %v104, %v161
    %vm163 = vcmp.eq.f32.partialorder %v104, inf
    %v164 = vsel %vm163, %v104, %v162
    %vm165 = vcmp.eq.f32.partialorder %v104, 0.0
    %v166 = vand.u32 %v104, 2147483648
    %v167 = vsel %vm165, %v166, %v164
    %v168 = vrsqrt.pop %v105
    %v169 = vmul.f32 %v105, %v168
    %vm170 = vcmp.eq.f32.partialorder %v105, inf
    %v171 = vsel %vm170, %v105, %v169
    %vm172 = vcmp.eq.f32.partialorder %v105, 0.0
    %v173 = vand.u32 %v105, 2147483648
    %v174 = vsel %vm172, %v173, %v171
    %v175 = vrsqrt.pop %v106
    %v176 = vmul.f32 %v106, %v175
    %vm177 = vcmp.eq.f32.partialorder %v106, inf
    %v178 = vsel %vm177, %v106, %v176
    %vm179 = vcmp.eq.f32.partialorder %v106, 0.0
    %v180 = vand.u32 %v106, 2147483648
    %v181 = vsel %vm179, %v180, %v178
    %v182 = vmul.f32 %v132, %v122
    %v183 = vmul.f32 %v139, %v123
    %v184 = vmul.f32 %v146, %v124
    %v185 = vmul.f32 %v153, %v125
    %v186 = vmul.f32 %v160, %v122
    %v187 = vmul.f32 %v167, %v123
    %v188 = vmul.f32 %v174, %v124
    %v189 = vmul.f32 %v181, %v125
    %v190 = vadd.f32 %v182, %v186
    %v191 = vrot.slane %v190, 4
    %v192 = vadd.f32 %v190, %v191
    %v193 = vrot.slane %v192, 2
    %v194 = vadd.f32 %v192, %v193
    %v195 = vrot.slane %v194, 1
    %v196 = vadd.f32 %v194, %v195
    %v197 = vadd.f32 %v183, %v187
    %v198 = vrot.slane %v197, 4
    %v199 = vadd.f32 %v197, %v198
    %v200 = vrot.slane %v199, 2
    %v201 = vadd.f32 %v199, %v200
    %v202 = vrot.slane %v201, 1
    %v203 = vadd.f32 %v201, %v202
    %v204 = vadd.f32 %v184, %v188
    %v205 = vrot.slane %v204, 4
    %v206 = vadd.f32 %v204, %v205
    %v207 = vrot.slane %v206, 2
    %v208 = vadd.f32 %v206, %v207
    %v209 = vrot.slane %v208, 1
    %v210 = vadd.f32 %v208, %v209
    %v211 = vadd.f32 %v185, %v189
    %v212 = vrot.slane %v211, 4
    %v213 = vadd.f32 %v211, %v212
    %v214 = vrot.slane %v213, 2
    %v215 = vadd.f32 %v213, %v214
    %v216 = vrot.slane %v215, 1
    %v217 = vadd.f32 %v215, %v216
    %v222 = vcombine.low %v196, %v203
    %v223 = vcombine.low %v210, %v217
    %v225 = vunpack.c.l.s4 1966171168
    %v226 = vunpack.c.0.s8 %v225
    %v227 = vlaneseq
    %v228 = vshrl.u32 %v227, 7
    %v229 = vsub.s32 %v226, %v228
    %v230 = vrot.slane %v222, %v229
    %v232 = vunpack.c.l.s4 1966171168
    %v233 = vunpack.c.0.s8 %v232
    %v234 = vlaneseq
    %v235 = vshrl.u32 %v234, 7
    %v236 = vsub.s32 %v233, %v235
    %v237 = vrot.slane %v223, %v236
    %v238 = vcombine.low %v230, %v237
    %v240 = vunpack.c.l.s4 1966171168
    %v241 = vunpack.c.0.s8 %v240
    %v242 = vlaneseq
    %v243 = vshrl.u32 %v242, 7
    %v244 = vsub.s32 %v241, %v243
    %v245 = vrot.slane %v238, %v244
    %v247 = vlaneseq
    %vm248 = vcmp.ge.s32.totalorder %v247, 0
    %vm249 = vcmp.lt.s32.totalorder %v247, 512
    %vm250 = vmand %vm248, %vm249
    %251 = vst.msk [vmem:[#allocation7] sm:$0xf] %vm250, %v245
    // Predicated region
    $region18: #{tpu_custom_call.1} parent=1 // pred_check
      _
    $region19: #{tpu_custom_call.1} parent=1 // pred_check_branch
      %253 = sbr.rel (0) target = $region21
    $region20: #{tpu_custom_call.1} parent=1 // pred_region
      %s255 = ssub.s32 64, 64
      %256 = vsyncadd [#allocation4], %s255
      %s258 = sshll.u32 [#allocation7], 4
      %s259 = int_to_ptr.vmem [resolvable:$true] %s258
      %261 = dma.vmem_to_hbm [thread:$0]  %s259, 64, %s2, [#allocation4]
    $region21: #{tpu_custom_call.1} parent=1 // pred_fallthru
      _
    // Predicated region
    $region22: #{tpu_custom_call.1} parent=1 // pred_check
      _
    $region23: #{tpu_custom_call.1} parent=1 // pred_check_branch
      %263 = sbr.rel (0) target = $region25
    $region24: #{tpu_custom_call.1} parent=1 // pred_region
      %264 = dma.done [#allocation4], 64
    $region25: #{tpu_custom_call.1} parent=1 // pred_fallthru
      _
    %265 = vsyncpa [#allocation3], 1
    %266 = vsyncpa [#allocation6], 1
    %267 = vsyncpa [#allocation4], 1

</llo_original>
